<compile_context>
chip_gen: v5e
topology: v5e:2x2
jax: 0.10.0
libtpu: 0.0.40
codegen_flags: <defaults>
</compile_context>

<pallas_src>
import jax
import jax.numpy as jnp
from jax.experimental import pallas as pl
from jax.experimental.pallas import tpu as pltpu

# ---- config (mirrors configs/attention_config.yaml) ----
N_HEADS = 4
EMBED_DIM = 32
HEAD_DIM = EMBED_DIM // N_HEADS
DROP_RATE = 0.1          # unused at inference time (identity)

BATCH = 2
SEQ = 8


def attention_forward(x, w_qkv, w_out, b_out):
    """x: (B, S, E) -> (B, S, E).  Weights are (in, out) so the kernel does x @ W
    (equivalent to torch's x @ W.T with W of shape (out, in))."""
    B, S, E = x.shape
    H = N_HEADS
    Dh = E // H
    scale = 1.0 / (Dh ** 0.5)

    def kernel(x_ref, wqkv_ref, wout_ref, bout_ref, o_ref):
        # x_ref: (B*S, E); weights/bias whole-array resident in VMEM; o_ref: (B*S, E).
        x2 = x_ref[...].astype(jnp.float32)                               # (B*S, E)

        # QKV projection over all tokens at once (nn.Linear(E, 3E, bias=False)).
        qkv = jnp.dot(x2, wqkv_ref[...].astype(jnp.float32),
                      preferred_element_type=jnp.float32)                 # (B*S, 3E)

        # Regroup heads into a leading batch axis: (H*B, S, Dh).
        # Block n = h*B + b holds (batch b, head h).  Only lane slices, leading-dim
        # reshapes and a major-axis concat -- no transposes inside the kernel.
        def to_heads(t2):
            return jnp.concatenate(
                [t2[:, h * Dh:(h + 1) * Dh].reshape(B, S, Dh) for h in range(H)],
                axis=0)

        q = to_heads(qkv[:, 0 * E:1 * E])                                 # (H*B, S, Dh)
        k = to_heads(qkv[:, 1 * E:2 * E])
        v = to_heads(qkv[:, 2 * E:3 * E])

        # Batched QK^T: contract over d directly (no explicit k.T).
        s = jnp.einsum('nqd,nkd->nqk', q, k,
                       preferred_element_type=jnp.float32) * scale        # (H*B, S, S)

        # One numerically-stable softmax over all heads/batches at once.
        s = s - jnp.max(s, axis=-1, keepdims=True)
        p = jnp.exp(s)
        p = p * pl.reciprocal(jnp.sum(p, axis=-1, keepdims=True), approx=True)

        # Batched PV.
        ctx = jnp.einsum('nqk,nkd->nqd', p, v,
                         preferred_element_type=jnp.float32)              # (H*B, S, Dh)

        # Back to (B*S, E): head h -> lanes [h*Dh : (h+1)*Dh].
        attn = jnp.concatenate(
            [ctx[h * B:(h + 1) * B].reshape(B * S, Dh) for h in range(H)],
            axis=-1)                                                      # (B*S, E)

        # Output projection + bias (nn.Linear(E, E); dropout = identity in eval mode).
        out = jnp.dot(attn, wout_ref[...].astype(jnp.float32),
                      preferred_element_type=jnp.float32)
        out = out + bout_ref[...].astype(jnp.float32)                     # (B*S, E)

        # TODO(synk): for scaled-up E/S, cast matmul operands to bf16 (v6e/v7x MXU)
        # and widen the output slab to >=128 lanes for unmasked stores.
        o_ref[...] = out.astype(o_ref.dtype)

    out2 = pl.pallas_call(
        kernel,
        out_shape=jax.ShapeDtypeStruct((B * S, E), x.dtype),
        in_specs=[
            pl.BlockSpec(memory_space=pltpu.MemorySpace.VMEM),   # x (flattened tokens)
            pl.BlockSpec(memory_space=pltpu.MemorySpace.VMEM),   # W_qkv (E, 3E)
            pl.BlockSpec(memory_space=pltpu.MemorySpace.VMEM),   # W_out (E, E)
            pl.BlockSpec(memory_space=pltpu.MemorySpace.VMEM),   # b_out (1, E)
        ],
        out_specs=pl.BlockSpec(memory_space=pltpu.MemorySpace.VMEM),
    )(x.reshape(B * S, E), w_qkv, w_out, b_out.reshape(1, E))

    return out2.reshape(B, S, E)


def attention_reference(x, w_qkv, w_out, b_out):
    """Pure-JAX reference matching the PyTorch forward (eval mode)."""
    B, S, E = x.shape
    qkv = x @ w_qkv                                             # (B, S, 3E)
    q, k, v = jnp.split(qkv, 3, axis=-1)

    def split_heads(t):
        return t.reshape(B, S, N_HEADS, HEAD_DIM).transpose(0, 2, 1, 3)

    q, k, v = split_heads(q), split_heads(k), split_heads(v)    # (B, H, S, Dh)
    scores = jnp.einsum("bhqd,bhkd->bhqk", q, k) / (HEAD_DIM ** 0.5)
    probs = jax.nn.softmax(scores, axis=-1)
    out = jnp.einsum("bhqk,bhkd->bhqd", probs, v)               # (B, H, S, Dh)
    out = out.transpose(0, 2, 1, 3).reshape(B, S, E)
    return out @ w_out + b_out


if __name__ == "__main__":
    key = jax.random.PRNGKey(0)
    kx, kqkv, kout, kb = jax.random.split(key, 4)

    # deterministic synthetic parameters (shapes from the module's __init__)
    x = jax.random.normal(kx, (BATCH, SEQ, EMBED_DIM), dtype=jnp.float32)
    w_qkv = jax.random.normal(kqkv, (EMBED_DIM, 3 * EMBED_DIM), dtype=jnp.float32) * 0.05
    w_out = jax.random.normal(kout, (EMBED_DIM, EMBED_DIM), dtype=jnp.float32) * 0.05
    b_out = jax.random.normal(kb, (EMBED_DIM,), dtype=jnp.float32) * 0.05

    out = attention_forward(x, w_qkv, w_out, b_out)
    out = jax.block_until_ready(out)

    ref = attention_reference(x, w_qkv, w_out, b_out)
    assert out.shape == (BATCH, SEQ, EMBED_DIM)
    # Tolerance loosened from 1e-4 -> 1e-3 to accommodate the approx (EUP vrcp)
    # softmax reciprocal; everything else is exact f32.
    assert jnp.allclose(out, ref, atol=1e-3, rtol=1e-3), "mismatch vs reference"

    print("KERNEL_OK")
</pallas_src>

<mosaic_0001>
module attributes {stable_mosaic.version = 11 : i64} {
  func.func @kernel(%arg0: memref<16x32xf32, #tpu.memory_space<vmem>>, %arg1: memref<32x96xf32, #tpu.memory_space<vmem>>, %arg2: memref<32x32xf32, #tpu.memory_space<vmem>>, %arg3: memref<1x32xf32, #tpu.memory_space<vmem>>, %arg4: memref<16x32xf32, #tpu.memory_space<vmem>>) attributes {dimension_semantics = [], scalar_prefetch = 0 : i64, scratch_operands = 0 : i64, tpu.core_type = #tpu.core_type<tc>} {
    %c0 = arith.constant 0 : index
    %c0_0 = arith.constant 0 : index
    %0 = vector.load %arg0[%c0, %c0_0] : memref<16x32xf32, #tpu.memory_space<vmem>>, vector<16x32xf32>
    %c0_1 = arith.constant 0 : index
    %c0_2 = arith.constant 0 : index
    %1 = vector.load %arg1[%c0_1, %c0_2] : memref<32x96xf32, #tpu.memory_space<vmem>>, vector<32x96xf32>
    %cst = arith.constant dense<0.000000e+00> : vector<16x96xf32>
    %2 = tpu.matmul %0, %1, %cst {dimension_numbers = #tpu.dot_dimension_numbers<[1], [0], [0], [1], [0, 0, 1, 1], [], []>} : vector<16x32xf32>, vector<32x96xf32>, vector<16x96xf32> -> vector<16x96xf32>
    %3 = vector.extract_strided_slice %2 {offsets = [0, 0], sizes = [16, 32], strides = [1, 1]} : vector<16x96xf32> to vector<16x32xf32>
    %4 = vector.extract_strided_slice %3 {offsets = [0, 0], sizes = [16, 8], strides = [1, 1]} : vector<16x32xf32> to vector<16x8xf32>
    %5 = vector.shape_cast %4 : vector<16x8xf32> to vector<2x8x8xf32>
    %6 = vector.extract_strided_slice %3 {offsets = [0, 8], sizes = [16, 8], strides = [1, 1]} : vector<16x32xf32> to vector<16x8xf32>
    %7 = vector.shape_cast %6 : vector<16x8xf32> to vector<2x8x8xf32>
    %8 = vector.extract_strided_slice %3 {offsets = [0, 16], sizes = [16, 8], strides = [1, 1]} : vector<16x32xf32> to vector<16x8xf32>
    %9 = vector.shape_cast %8 : vector<16x8xf32> to vector<2x8x8xf32>
    %10 = vector.extract_strided_slice %3 {offsets = [0, 24], sizes = [16, 8], strides = [1, 1]} : vector<16x32xf32> to vector<16x8xf32>
    %11 = vector.shape_cast %10 : vector<16x8xf32> to vector<2x8x8xf32>
    %12 = tpu.concatenate %5, %7, %9, %11 in 0 : vector<2x8x8xf32>, vector<2x8x8xf32>, vector<2x8x8xf32>, vector<2x8x8xf32> -> vector<8x8x8xf32>
    %13 = vector.extract_strided_slice %2 {offsets = [0, 32], sizes = [16, 32], strides = [1, 1]} : vector<16x96xf32> to vector<16x32xf32>
    %14 = vector.extract_strided_slice %13 {offsets = [0, 0], sizes = [16, 8], strides = [1, 1]} : vector<16x32xf32> to vector<16x8xf32>
    %15 = vector.shape_cast %14 : vector<16x8xf32> to vector<2x8x8xf32>
    %16 = vector.extract_strided_slice %13 {offsets = [0, 8], sizes = [16, 8], strides = [1, 1]} : vector<16x32xf32> to vector<16x8xf32>
    %17 = vector.shape_cast %16 : vector<16x8xf32> to vector<2x8x8xf32>
    %18 = vector.extract_strided_slice %13 {offsets = [0, 16], sizes = [16, 8], strides = [1, 1]} : vector<16x32xf32> to vector<16x8xf32>
    %19 = vector.shape_cast %18 : vector<16x8xf32> to vector<2x8x8xf32>
    %20 = vector.extract_strided_slice %13 {offsets = [0, 24], sizes = [16, 8], strides = [1, 1]} : vector<16x32xf32> to vector<16x8xf32>
    %21 = vector.shape_cast %20 : vector<16x8xf32> to vector<2x8x8xf32>
    %22 = tpu.concatenate %15, %17, %19, %21 in 0 : vector<2x8x8xf32>, vector<2x8x8xf32>, vector<2x8x8xf32>, vector<2x8x8xf32> -> vector<8x8x8xf32>
    %23 = vector.extract_strided_slice %2 {offsets = [0, 64], sizes = [16, 32], strides = [1, 1]} : vector<16x96xf32> to vector<16x32xf32>
    %24 = vector.extract_strided_slice %23 {offsets = [0, 0], sizes = [16, 8], strides = [1, 1]} : vector<16x32xf32> to vector<16x8xf32>
    %25 = vector.shape_cast %24 : vector<16x8xf32> to vector<2x8x8xf32>
    %26 = vector.extract_strided_slice %23 {offsets = [0, 8], sizes = [16, 8], strides = [1, 1]} : vector<16x32xf32> to vector<16x8xf32>
    %27 = vector.shape_cast %26 : vector<16x8xf32> to vector<2x8x8xf32>
    %28 = vector.extract_strided_slice %23 {offsets = [0, 16], sizes = [16, 8], strides = [1, 1]} : vector<16x32xf32> to vector<16x8xf32>
    %29 = vector.shape_cast %28 : vector<16x8xf32> to vector<2x8x8xf32>
    %30 = vector.extract_strided_slice %23 {offsets = [0, 24], sizes = [16, 8], strides = [1, 1]} : vector<16x32xf32> to vector<16x8xf32>
    %31 = vector.shape_cast %30 : vector<16x8xf32> to vector<2x8x8xf32>
    %32 = tpu.concatenate %25, %27, %29, %31 in 0 : vector<2x8x8xf32>, vector<2x8x8xf32>, vector<2x8x8xf32>, vector<2x8x8xf32> -> vector<8x8x8xf32>
    "tpu.trace_start"() <{level = 10 : i32, message = "nqd,nkd->nqk"}> : () -> ()
    %cst_3 = arith.constant dense<0.000000e+00> : vector<8x8x8xf32>
    %33 = tpu.matmul %12, %22, %cst_3 {dimension_numbers = #tpu.dot_dimension_numbers<[2], [2], [1], [1], [0, 0, 0, 1, 1, 1], [0], [0]>} : vector<8x8x8xf32>, vector<8x8x8xf32>, vector<8x8x8xf32> -> vector<8x8x8xf32>
    "tpu.trace_stop"() : () -> ()
    %cst_4 = arith.constant 0.353553385 : f32
    %34 = vector.broadcast %cst_4 : f32 to vector<8x8x8xf32>
    %35 = arith.mulf %33, %34 : vector<8x8x8xf32>
    %cst_5 = arith.constant dense<0xFF800000> : vector<8x8xf32>
    %36 = vector.multi_reduction <maximumf>, %35, %cst_5 [2] : vector<8x8x8xf32> to vector<8x8xf32>
    %37 = vector.shape_cast %36 : vector<8x8xf32> to vector<8x8x1xf32>
    %38 = vector.broadcast %37 : vector<8x8x1xf32> to vector<8x8x8xf32>
    %39 = arith.subf %35, %38 : vector<8x8x8xf32>
    %40 = math.exp %39 : vector<8x8x8xf32>
    %cst_6 = arith.constant dense<0.000000e+00> : vector<8x8xf32>
    %41 = vector.multi_reduction <add>, %40, %cst_6 [2] : vector<8x8x8xf32> to vector<8x8xf32>
    %42 = vector.shape_cast %41 : vector<8x8xf32> to vector<8x8x1xf32>
    %43 = tpu.reciprocal %42 {approx = true} : vector<8x8x1xf32> -> vector<8x8x1xf32>
    %44 = vector.broadcast %43 : vector<8x8x1xf32> to vector<8x8x8xf32>
    %45 = arith.mulf %40, %44 : vector<8x8x8xf32>
    "tpu.trace_start"() <{level = 10 : i32, message = "nqk,nkd->nqd"}> : () -> ()
    %cst_7 = arith.constant dense<0.000000e+00> : vector<8x8x8xf32>
    %46 = tpu.matmul %45, %32, %cst_7 {dimension_numbers = #tpu.dot_dimension_numbers<[2], [1], [1], [2], [0, 0, 0, 1, 1, 2], [0], [0]>} : vector<8x8x8xf32>, vector<8x8x8xf32>, vector<8x8x8xf32> -> vector<8x8x8xf32>
    "tpu.trace_stop"() : () -> ()
    %47 = vector.extract_strided_slice %46 {offsets = [0, 0, 0], sizes = [2, 8, 8], strides = [1, 1, 1]} : vector<8x8x8xf32> to vector<2x8x8xf32>
    %48 = vector.shape_cast %47 : vector<2x8x8xf32> to vector<16x8xf32>
    %49 = vector.extract_strided_slice %46 {offsets = [2, 0, 0], sizes = [2, 8, 8], strides = [1, 1, 1]} : vector<8x8x8xf32> to vector<2x8x8xf32>
    %50 = vector.shape_cast %49 : vector<2x8x8xf32> to vector<16x8xf32>
    %51 = vector.extract_strided_slice %46 {offsets = [4, 0, 0], sizes = [2, 8, 8], strides = [1, 1, 1]} : vector<8x8x8xf32> to vector<2x8x8xf32>
    %52 = vector.shape_cast %51 : vector<2x8x8xf32> to vector<16x8xf32>
    %53 = vector.extract_strided_slice %46 {offsets = [6, 0, 0], sizes = [2, 8, 8], strides = [1, 1, 1]} : vector<8x8x8xf32> to vector<2x8x8xf32>
    %54 = vector.shape_cast %53 : vector<2x8x8xf32> to vector<16x8xf32>
    %55 = tpu.concatenate %48, %50, %52, %54 in 1 : vector<16x8xf32>, vector<16x8xf32>, vector<16x8xf32>, vector<16x8xf32> -> vector<16x32xf32>
    %c0_8 = arith.constant 0 : index
    %c0_9 = arith.constant 0 : index
    %56 = vector.load %arg2[%c0_8, %c0_9] : memref<32x32xf32, #tpu.memory_space<vmem>>, vector<32x32xf32>
    %cst_10 = arith.constant dense<0.000000e+00> : vector<16x32xf32>
    %57 = tpu.matmul %55, %56, %cst_10 {dimension_numbers = #tpu.dot_dimension_numbers<[1], [0], [0], [1], [0, 0, 1, 1], [], []>} : vector<16x32xf32>, vector<32x32xf32>, vector<16x32xf32> -> vector<16x32xf32>
    %c0_11 = arith.constant 0 : index
    %c0_12 = arith.constant 0 : index
    %58 = vector.load %arg3[%c0_11, %c0_12] : memref<1x32xf32, #tpu.memory_space<vmem>>, vector<1x32xf32>
    %59 = vector.broadcast %58 : vector<1x32xf32> to vector<16x32xf32>
    %60 = arith.addf %57, %59 : vector<16x32xf32>
    %c0_13 = arith.constant 0 : index
    %c0_14 = arith.constant 0 : index
    %61 = vector.load %arg4[%c0_13, %c0_14] : memref<16x32xf32, #tpu.memory_space<vmem>>, vector<16x32xf32>
    tpu.vector_store %arg4[%c0_13, %c0_14], %60 {strides = array<i32>} : memref<16x32xf32, #tpu.memory_space<vmem>>, vector<16x32xf32>,
    return
  }
}

</mosaic_0001>

<llo_original>
// kernel: tpu_custom_call.1
$region0: #{tpu_custom_call.1}
  #allocation0 [shape = 'u32[]', space=smem, size = 0x4, offset = 0x4, fixed_abs, tag = 'smem constant byte address 0x4 - core index']
  #allocation1 [shape = 'u32[72,128]{1,0:T(1,128)}', space=vmem, size = 0x9000, scoped, tag = 'internal scratch']
  %s0 = inlined_call_operand.hbm [shape: f32[16,32], index: 0, kind: input, shape index: {}]
  %s1 = inlined_call_operand.hbm [shape: f32[32,96], index: 1, kind: input, shape index: {}]
  %s2 = inlined_call_operand.hbm [shape: f32[32,32], index: 2, kind: input, shape index: {}]
  %s3 = inlined_call_operand.vmem [shape: f32[1,32], index: 3, kind: input, shape index: {}]
  %s4 = inlined_call_operand.hbm [shape: f32[16,32], index: 4, kind: output, shape index: {}]
  %s5 = sld [smem:[#allocation0]]
  $region38: #{tpu_custom_call.1} parent=0
    _
  %s7 = ssub.s32 1, %s5
  %s8 = scalar_select 0, %s7, %s5
  $region1: #{tpu_custom_call.1} parent=0
    #allocation2 [shape = 'u8[8192]{0}', space=vmem, size = 0x2000, scoped, tag = 'input window, operand 0, single buffered']
    #allocation3 [shape = 's32[1]{0}', space=sflag, size = 0x4, scoped, tag = 'scoped memory for tpu_custom_call.1']
    #allocation4 [shape = 's32[1]{0}', space=sflag, size = 0x4, scoped, tag = 'scoped memory for tpu_custom_call.1']
    #allocation5 [shape = 'u8[16384]{0}', space=vmem, size = 0x4000, scoped, tag = 'input window, operand 1, single buffered']
    #allocation6 [shape = 's32[1]{0}', space=sflag, size = 0x4, scoped, tag = 'scoped memory for tpu_custom_call.1']
    #allocation7 [shape = 'u8[16384]{0}', space=vmem, size = 0x4000, scoped, tag = 'input window, operand 2, single buffered']
    #allocation8 [shape = 'u8[8192]{0}', space=vmem, size = 0x2000, scoped, tag = 'output window, operand 0, single buffered']
    %9 = vsyncpa [#allocation3], 0
    %10 = vsyncpa [#allocation6], 0
    %11 = vsyncpa [#allocation4], 0
    // Predicated region
    $region2: #{tpu_custom_call.1} parent=1 // pred_check
      _
    $region3: #{tpu_custom_call.1} parent=1 // pred_check_branch
      %13 = sbr.rel (0) target = $region5
    $region4: #{tpu_custom_call.1} parent=1 // pred_region
      %15 = vsyncadd [#allocation3], 0
      %s16 = sshll.u32 %s0, 4
      %s17 = int_to_ptr.hbm [resolvable:$true] %s16
      %s18 = sshll.u32 [#allocation2], 4
      %s19 = int_to_ptr.vmem [resolvable:$true] %s18
      %24 = dma.hbm_to_vmem [thread:$0]  %s17, 256, %s19, [#allocation3], 128, 128, 8
    $region5: #{tpu_custom_call.1} parent=1 // pred_fallthru
      _
    // Predicated region
    $region6: #{tpu_custom_call.1} parent=1 // pred_check
      _
    $region7: #{tpu_custom_call.1} parent=1 // pred_check_branch
      %26 = sbr.rel (0) target = $region9
    $region8: #{tpu_custom_call.1} parent=1 // pred_region
      %28 = vsyncadd [#allocation6], 0
      %s29 = sshll.u32 %s1, 4
      %s30 = int_to_ptr.hbm [resolvable:$true] %s29
      %s31 = sshll.u32 [#allocation5], 4
      %s32 = int_to_ptr.vmem [resolvable:$true] %s31
      %37 = dma.hbm_to_vmem [thread:$0]  %s30, 512, %s32, [#allocation6], 128, 128, 8
    $region9: #{tpu_custom_call.1} parent=1 // pred_fallthru
      _
    // Predicated region
    $region10: #{tpu_custom_call.1} parent=1 // pred_check
      _
    $region11: #{tpu_custom_call.1} parent=1 // pred_check_branch
      %39 = sbr.rel (0) target = $region13
    $region12: #{tpu_custom_call.1} parent=1 // pred_region
      %41 = vsyncadd [#allocation6], 0
      %s42 = sshll.u32 %s2, 4
      %s43 = int_to_ptr.hbm [resolvable:$true] %s42
      %s44 = sshll.u32 [#allocation7], 4
      %s45 = int_to_ptr.vmem [resolvable:$true] %s44
      %50 = dma.hbm_to_vmem [thread:$0]  %s43, 512, %s45, [#allocation6], 128, 128, 8
    $region13: #{tpu_custom_call.1} parent=1 // pred_fallthru
      _
    // Predicated region
    $region14: #{tpu_custom_call.1} parent=1 // pred_check
      _
    $region15: #{tpu_custom_call.1} parent=1 // pred_check_branch
      %52 = sbr.rel (0) target = $region17
    $region16: #{tpu_custom_call.1} parent=1 // pred_region
      _
    $region17: #{tpu_custom_call.1} parent=1 // pred_fallthru
      _
    // Predicated region
    $region18: #{tpu_custom_call.1} parent=1 // pred_check
      _
    $region19: #{tpu_custom_call.1} parent=1 // pred_check_branch
      %54 = sbr.rel (0) target = $region21
    $region20: #{tpu_custom_call.1} parent=1 // pred_region
      %56 = dma.done [#allocation3], 256
    $region21: #{tpu_custom_call.1} parent=1 // pred_fallthru
      _
    // Predicated region
    $region22: #{tpu_custom_call.1} parent=1 // pred_check
      _
    $region23: #{tpu_custom_call.1} parent=1 // pred_check_branch
      %58 = sbr.rel (0) target = $region25
    $region24: #{tpu_custom_call.1} parent=1 // pred_region
      %60 = dma.done [#allocation6], 512
    $region25: #{tpu_custom_call.1} parent=1 // pred_fallthru
      _
    // Predicated region
    $region26: #{tpu_custom_call.1} parent=1 // pred_check
      _
    $region27: #{tpu_custom_call.1} parent=1 // pred_check_branch
      %62 = sbr.rel (0) target = $region29
    $region28: #{tpu_custom_call.1} parent=1 // pred_region
      %64 = dma.done [#allocation6], 512
    $region29: #{tpu_custom_call.1} parent=1 // pred_fallthru
      _
    %v65 = vld [vmem:[#allocation2] sm:$0xff]
    %v66 = vld [vmem:[#allocation2 + $0x8] sm:$0xff]
    %v67 = vld [vmem:[#allocation5] sm:$0xff]
    %v68 = vld [vmem:[#allocation5 + $0x8] sm:$0xff]
    %v69 = vld [vmem:[#allocation5 + $0x10] sm:$0xff]
    %v70 = vld [vmem:[#allocation5 + $0x18] sm:$0xff]
    %vm71 = vcmask 261120
    %v73 = vsel %vm71, %v65, 0
    %v76 = vsel %vm71, %v66, 0
    %78 = vmatpush.msra.mxu0 0.0
    %79 = vmatpush.msra.mxu0 0.0
    %80 = vmatpush.msra.mxu0 0.0
    %81 = vmatpush.msra.mxu0 0.0
    %82 = vmatpush.msra.mxu0 0.0
    %83 = vmatpush.msra.mxu0 0.0
    %84 = vmatpush.msra.mxu0 0.0
    %85 = vmatpush.msra.mxu0 0.0
    %86 = vmatpush.msra.mxu0 0.0
    %87 = vmatpush.msra.mxu0 0.0
    %88 = vmatpush.msra.mxu0 0.0
    %89 = vmatpush.msra.mxu0 0.0
    %90 = vmatpush.msra.mxu0 %v70
    %91 = vmatpush.msra.mxu0 %v69
    %92 = vmatpush.msra.mxu0 %v68
    %93 = vmatpush.msra.mxu0 %v67
    %94 = vmatmul.f32.gmra.mxu0 %v73
    %v95 = vpop.f32.mrf.mxu0
    %v96 = vadd.f32 0.0, %v95
    %97 = vmatmul.f32.gmra.mxu0 %v76
    %v98 = vpop.f32.mrf.mxu0
    %v99 = vadd.f32 0.0, %v98
    %100 = vdwg.mxu0
    %103 = vrot.lane.b32.xlu0 %v96, 120
    %v104 = vpop.permute.xlu0 %103
    %105 = vrot.lane.b32.xlu0 %v99, 120
    %v106 = vpop.permute.xlu0 %105
    %107 = vrot.lane.b32.xlu0 %v96, 112
    %v108 = vpop.permute.xlu0 %107
    %109 = vrot.lane.b32.xlu0 %v99, 112
    %v110 = vpop.permute.xlu0 %109
    %111 = vrot.lane.b32.xlu0 %v96, 104
    %v112 = vpop.permute.xlu0 %111
    %113 = vrot.lane.b32.xlu0 %v99, 104
    %v114 = vpop.permute.xlu0 %113
    %115 = vrot.lane.b32.xlu0 %v96, 96
    %v116 = vpop.permute.xlu0 %115
    %vm117 = vcmask 64512
    %v118 = vsel %vm117, %v96, 0
    %v120 = vsel %vm117, %v116, 0
    %122 = vmatpush.xpose.msra.mxu0 0.0
    %123 = vmatpush.xpose.msra.mxu0 0.0
    %124 = vmatpush.xpose.msra.mxu0 0.0
    %125 = vmatpush.xpose.msra.mxu0 0.0
    %126 = vmatpush.xpose.msra.mxu0 0.0
    %127 = vmatpush.xpose.msra.mxu0 0.0
    %128 = vmatpush.xpose.msra.mxu0 0.0
    %129 = vmatpush.xpose.msra.mxu0 0.0
    %130 = vmatpush.xpose.msra.mxu0 0.0
    %131 = vmatpush.xpose.msra.mxu0 0.0
    %132 = vmatpush.xpose.msra.mxu0 0.0
    %133 = vmatpush.xpose.msra.mxu0 0.0
    %134 = vmatpush.xpose.msra.mxu0 0.0
    %135 = vmatpush.xpose.msra.mxu0 0.0
    %136 = vmatpush.xpose.msra.mxu0 0.0
    %137 = vmatpush.xpose.msra.mxu0 %v120
    %138 = vmatmul.f32.gmra.mxu0 %v118
    %v139 = vpop.f32.mrf.mxu0
    %v140 = vadd.f32 0.0, %v139
    %141 = vdwg.mxu0
    %142 = vrot.lane.b32.xlu0 %v99, 96
    %v143 = vpop.permute.xlu0 %142
    %v144 = vsel %vm117, %v99, 0
    %v146 = vsel %vm117, %v143, 0
    %148 = vmatpush.xpose.msra.mxu0 0.0
    %149 = vmatpush.xpose.msra.mxu0 0.0
    %150 = vmatpush.xpose.msra.mxu0 0.0
    %151 = vmatpush.xpose.msra.mxu0 0.0
    %152 = vmatpush.xpose.msra.mxu0 0.0
    %153 = vmatpush.xpose.msra.mxu0 0.0
    %154 = vmatpush.xpose.msra.mxu0 0.0
    %155 = vmatpush.xpose.msra.mxu0 0.0
    %156 = vmatpush.xpose.msra.mxu0 0.0
    %157 = vmatpush.xpose.msra.mxu0 0.0
    %158 = vmatpush.xpose.msra.mxu0 0.0
    %159 = vmatpush.xpose.msra.mxu0 0.0
    %160 = vmatpush.xpose.msra.mxu0 0.0
    %161 = vmatpush.xpose.msra.mxu0 0.0
    %162 = vmatpush.xpose.msra.mxu0 0.0
    %163 = vmatpush.xpose.msra.mxu0 %v146
    %164 = vmatmul.f32.gmra.mxu0 %v144
    %v165 = vpop.f32.mrf.mxu0
    %v166 = vadd.f32 0.0, %v165
    %167 = vdwg.mxu0
    %168 = vrot.lane.b32.xlu0 %v104, 96
    %v169 = vpop.permute.xlu0 %168
    %v170 = vsel %vm117, %v104, 0
    %v172 = vsel %vm117, %v169, 0
    %174 = vmatpush.xpose.msra.mxu0 0.0
    %175 = vmatpush.xpose.msra.mxu0 0.0
    %176 = vmatpush.xpose.msra.mxu0 0.0
    %177 = vmatpush.xpose.msra.mxu0 0.0
    %178 = vmatpush.xpose.msra.mxu0 0.0
    %179 = vmatpush.xpose.msra.mxu0 0.0
    %180 = vmatpush.xpose.msra.mxu0 0.0
    %181 = vmatpush.xpose.msra.mxu0 0.0
    %182 = vmatpush.xpose.msra.mxu0 0.0
    %183 = vmatpush.xpose.msra.mxu0 0.0
    %184 = vmatpush.xpose.msra.mxu0 0.0
    %185 = vmatpush.xpose.msra.mxu0 0.0
    %186 = vmatpush.xpose.msra.mxu0 0.0
    %187 = vmatpush.xpose.msra.mxu0 0.0
    %188 = vmatpush.xpose.msra.mxu0 0.0
    %189 = vmatpush.xpose.msra.mxu0 %v172
    %190 = vmatmul.f32.gmra.mxu0 %v170
    %v191 = vpop.f32.mrf.mxu0
    %v192 = vadd.f32 0.0, %v191
    %193 = vdwg.mxu0
    %194 = vrot.lane.b32.xlu0 %v106, 96
    %v195 = vpop.permute.xlu0 %194
    %v196 = vsel %vm117, %v106, 0
    %v198 = vsel %vm117, %v195, 0
    %200 = vmatpush.xpose.msra.mxu0 0.0
    %201 = vmatpush.xpose.msra.mxu0 0.0
    %202 = vmatpush.xpose.msra.mxu0 0.0
    %203 = vmatpush.xpose.msra.mxu0 0.0
    %204 = vmatpush.xpose.msra.mxu0 0.0
    %205 = vmatpush.xpose.msra.mxu0 0.0
    %206 = vmatpush.xpose.msra.mxu0 0.0
    %207 = vmatpush.xpose.msra.mxu0 0.0
    %208 = vmatpush.xpose.msra.mxu0 0.0
    %209 = vmatpush.xpose.msra.mxu0 0.0
    %210 = vmatpush.xpose.msra.mxu0 0.0
    %211 = vmatpush.xpose.msra.mxu0 0.0
    %212 = vmatpush.xpose.msra.mxu0 0.0
    %213 = vmatpush.xpose.msra.mxu0 0.0
    %214 = vmatpush.xpose.msra.mxu0 0.0
    %215 = vmatpush.xpose.msra.mxu0 %v198
    %216 = vmatmul.f32.gmra.mxu0 %v196
    %v217 = vpop.f32.mrf.mxu0
    %v218 = vadd.f32 0.0, %v217
    %219 = vdwg.mxu0
    %220 = vrot.lane.b32.xlu0 %v108, 96
    %v221 = vpop.permute.xlu0 %220
    %v222 = vsel %vm117, %v108, 0
    %v224 = vsel %vm117, %v221, 0
    %226 = vmatpush.xpose.msra.mxu0 0.0
    %227 = vmatpush.xpose.msra.mxu0 0.0
    %228 = vmatpush.xpose.msra.mxu0 0.0
    %229 = vmatpush.xpose.msra.mxu0 0.0
    %230 = vmatpush.xpose.msra.mxu0 0.0
    %231 = vmatpush.xpose.msra.mxu0 0.0
    %232 = vmatpush.xpose.msra.mxu0 0.0
    %233 = vmatpush.xpose.msra.mxu0 0.0
    %234 = vmatpush.xpose.msra.mxu0 0.0
    %235 = vmatpush.xpose.msra.mxu0 0.0
    %236 = vmatpush.xpose.msra.mxu0 0.0
    %237 = vmatpush.xpose.msra.mxu0 0.0
    %238 = vmatpush.xpose.msra.mxu0 0.0
    %239 = vmatpush.xpose.msra.mxu0 0.0
    %240 = vmatpush.xpose.msra.mxu0 0.0
    %241 = vmatpush.xpose.msra.mxu0 %v224
    %242 = vmatmul.f32.gmra.mxu0 %v222
    %v243 = vpop.f32.mrf.mxu0
    %v244 = vadd.f32 0.0, %v243
    %245 = vdwg.mxu0
    %246 = vrot.lane.b32.xlu0 %v110, 96
    %v247 = vpop.permute.xlu0 %246
    %v248 = vsel %vm117, %v110, 0
    %v250 = vsel %vm117, %v247, 0
    %252 = vmatpush.xpose.msra.mxu0 0.0
    %253 = vmatpush.xpose.msra.mxu0 0.0
    %254 = vmatpush.xpose.msra.mxu0 0.0
    %255 = vmatpush.xpose.msra.mxu0 0.0
    %256 = vmatpush.xpose.msra.mxu0 0.0
    %257 = vmatpush.xpose.msra.mxu0 0.0
    %258 = vmatpush.xpose.msra.mxu0 0.0
    %259 = vmatpush.xpose.msra.mxu0 0.0
    %260 = vmatpush.xpose.msra.mxu0 0.0
    %261 = vmatpush.xpose.msra.mxu0 0.0
    %262 = vmatpush.xpose.msra.mxu0 0.0
    %263 = vmatpush.xpose.msra.mxu0 0.0
    %264 = vmatpush.xpose.msra.mxu0 0.0
    %265 = vmatpush.xpose.msra.mxu0 0.0
    %266 = vmatpush.xpose.msra.mxu0 0.0
    %267 = vmatpush.xpose.msra.mxu0 %v250
    %268 = vmatmul.f32.gmra.mxu0 %v248
    %v269 = vpop.f32.mrf.mxu0
    %v270 = vadd.f32 0.0, %v269
    %271 = vdwg.mxu0
    %272 = vrot.lane.b32.xlu0 %v112, 96
    %v273 = vpop.permute.xlu0 %272
    %v274 = vsel %vm117, %v112, 0
    %v276 = vsel %vm117, %v273, 0
    %278 = vmatpush.xpose.msra.mxu0 0.0
    %279 = vmatpush.xpose.msra.mxu0 0.0
    %280 = vmatpush.xpose.msra.mxu0 0.0
    %281 = vmatpush.xpose.msra.mxu0 0.0
    %282 = vmatpush.xpose.msra.mxu0 0.0
    %283 = vmatpush.xpose.msra.mxu0 0.0
    %284 = vmatpush.xpose.msra.mxu0 0.0
    %285 = vmatpush.xpose.msra.mxu0 0.0
    %286 = vmatpush.xpose.msra.mxu0 0.0
    %287 = vmatpush.xpose.msra.mxu0 0.0
    %288 = vmatpush.xpose.msra.mxu0 0.0
    %289 = vmatpush.xpose.msra.mxu0 0.0
    %290 = vmatpush.xpose.msra.mxu0 0.0
    %291 = vmatpush.xpose.msra.mxu0 0.0
    %292 = vmatpush.xpose.msra.mxu0 0.0
    %293 = vmatpush.xpose.msra.mxu0 %v276
    %294 = vmatmul.f32.gmra.mxu0 %v274
    %v295 = vpop.f32.mrf.mxu0
    %v296 = vadd.f32 0.0, %v295
    %297 = vdwg.mxu0
    %298 = vrot.lane.b32.xlu0 %v114, 96
    %v299 = vpop.permute.xlu0 %298
    %v300 = vsel %vm117, %v114, 0
    %v302 = vsel %vm117, %v299, 0
    %304 = vmatpush.xpose.msra.mxu0 0.0
    %305 = vmatpush.xpose.msra.mxu0 0.0
    %306 = vmatpush.xpose.msra.mxu0 0.0
    %307 = vmatpush.xpose.msra.mxu0 0.0
    %308 = vmatpush.xpose.msra.mxu0 0.0
    %309 = vmatpush.xpose.msra.mxu0 0.0
    %310 = vmatpush.xpose.msra.mxu0 0.0
    %311 = vmatpush.xpose.msra.mxu0 0.0
    %312 = vmatpush.xpose.msra.mxu0 0.0
    %313 = vmatpush.xpose.msra.mxu0 0.0
    %314 = vmatpush.xpose.msra.mxu0 0.0
    %315 = vmatpush.xpose.msra.mxu0 0.0
    %316 = vmatpush.xpose.msra.mxu0 0.0
    %317 = vmatpush.xpose.msra.mxu0 0.0
    %318 = vmatpush.xpose.msra.mxu0 0.0
    %319 = vmatpush.xpose.msra.mxu0 %v302
    %320 = vmatmul.f32.gmra.mxu0 %v300
    %v321 = vpop.f32.mrf.mxu0
    %v322 = vadd.f32 0.0, %v321
    %323 = vdwg.mxu0
    %v324 = vmul.f32 %v140, 0.35355338
    %v325 = vmul.f32 %v166, 0.35355338
    %v326 = vmul.f32 %v192, 0.35355338
    %v327 = vmul.f32 %v218, 0.35355338
    %v328 = vmul.f32 %v244, 0.35355338
    %v329 = vmul.f32 %v270, 0.35355338
    %v330 = vmul.f32 %v296, 0.35355338
    %v331 = vmul.f32 %v322, 0.35355338
    %v332 = vsel %vm117, %v324, -inf
    %333 = vmax.xlane.f32.xlu0 %v332
    %v334 = vpop.xlane.xlu0 %333
    %v335 = vsel %vm117, %v325, -inf
    %336 = vmax.xlane.f32.xlu0 %v335
    %v337 = vpop.xlane.xlu0 %336
    %v338 = vsel %vm117, %v326, -inf
    %339 = vmax.xlane.f32.xlu0 %v338
    %v340 = vpop.xlane.xlu0 %339
    %v341 = vsel %vm117, %v327, -inf
    %342 = vmax.xlane.f32.xlu0 %v341
    %v343 = vpop.xlane.xlu0 %342
    %v344 = vsel %vm117, %v328, -inf
    %345 = vmax.xlane.f32.xlu0 %v344
    %v346 = vpop.xlane.xlu0 %345
    %v347 = vsel %vm117, %v329, -inf
    %348 = vmax.xlane.f32.xlu0 %v347
    %v349 = vpop.xlane.xlu0 %348
    %v350 = vsel %vm117, %v330, -inf
    %351 = vmax.xlane.f32.xlu0 %v350
    %v352 = vpop.xlane.xlu0 %351
    %v353 = vsel %vm117, %v331, -inf
    %354 = vmax.xlane.f32.xlu0 %v353
    %v355 = vpop.xlane.xlu0 %354
    %v356 = vsub.f32 %v324, %v334
    %v357 = vsub.f32 %v325, %v337
    %v358 = vsub.f32 %v326, %v340
    %v359 = vsub.f32 %v327, %v343
    %v360 = vsub.f32 %v328, %v346
    %v361 = vsub.f32 %v329, %v349
    %v362 = vsub.f32 %v330, %v352
    %v363 = vsub.f32 %v331, %v355
    %v364 = vmul.f32 %v356, 1.442695
    %v365 = vpow.pop %v364
    %v366 = vmul.f32 %v357, 1.442695
    %v367 = vpow.pop %v366
    %v368 = vmul.f32 %v358, 1.442695
    %v369 = vpow.pop %v368
    %v370 = vmul.f32 %v359, 1.442695
    %v371 = vpow.pop %v370
    %v372 = vmul.f32 %v360, 1.442695
    %v373 = vpow.pop %v372
    %v374 = vmul.f32 %v361, 1.442695
    %v375 = vpow.pop %v374
    %v376 = vmul.f32 %v362, 1.442695
    %v377 = vpow.pop %v376
    %v378 = vmul.f32 %v363, 1.442695
    %v379 = vpow.pop %v378
    %v380 = vsel %vm117, %v365, 0.0
    %381 = vadd.xlane.f32.xlu0 %v380
    %v382 = vpop.xlane.xlu0 %381
    %v383 = vsel %vm117, %v367, 0.0
    %384 = vadd.xlane.f32.xlu0 %v383
    %v385 = vpop.xlane.xlu0 %384
    %v386 = vsel %vm117, %v369, 0.0
    %387 = vadd.xlane.f32.xlu0 %v386
    %v388 = vpop.xlane.xlu0 %387
    %v389 = vsel %vm117, %v371, 0.0
    %390 = vadd.xlane.f32.xlu0 %v389
    %v391 = vpop.xlane.xlu0 %390
    %v392 = vsel %vm117, %v373, 0.0
    %393 = vadd.xlane.f32.xlu0 %v392
    %v394 = vpop.xlane.xlu0 %393
    %v395 = vsel %vm117, %v375, 0.0
    %396 = vadd.xlane.f32.xlu0 %v395
    %v397 = vpop.xlane.xlu0 %396
    %v398 = vsel %vm117, %v377, 0.0
    %399 = vadd.xlane.f32.xlu0 %v398
    %v400 = vpop.xlane.xlu0 %399
    %v401 = vsel %vm117, %v379, 0.0
    %402 = vadd.xlane.f32.xlu0 %v401
    %v403 = vpop.xlane.xlu0 %402
    %v404 = vrcp.pop %v382
    %v405 = vrcp.pop %v385
    %v406 = vrcp.pop %v388
    %v407 = vrcp.pop %v391
    %v408 = vrcp.pop %v394
    %v409 = vrcp.pop %v397
    %v410 = vrcp.pop %v400
    %v411 = vrcp.pop %v403
    %v412 = vmul.f32 %v365, %v404
    %v413 = vmul.f32 %v367, %v405
    %v414 = vmul.f32 %v369, %v406
    %v415 = vmul.f32 %v371, %v407
    %v416 = vmul.f32 %v373, %v408
    %v417 = vmul.f32 %v375, %v409
    %v418 = vmul.f32 %v377, %v410
    %v419 = vmul.f32 %v379, %v411
    %420 = vrot.lane.b32.xlu0 %v96, 64
    %v421 = vpop.permute.xlu0 %420
    %v424 = vsel %vm117, %v412, 0
    %426 = vmatpush.msra.mxu0 0.0
    %427 = vmatpush.msra.mxu0 0.0
    %428 = vmatpush.msra.mxu0 0.0
    %429 = vmatpush.msra.mxu0 0.0
    %430 = vmatpush.msra.mxu0 0.0
    %431 = vmatpush.msra.mxu0 0.0
    %432 = vmatpush.msra.mxu0 0.0
    %433 = vmatpush.msra.mxu0 0.0
    %434 = vmatpush.msra.mxu0 0.0
    %435 = vmatpush.msra.mxu0 0.0
    %436 = vmatpush.msra.mxu0 0.0
    %437 = vmatpush.msra.mxu0 0.0
    %438 = vmatpush.msra.mxu0 0.0
    %439 = vmatpush.msra.mxu0 0.0
    %440 = vmatpush.msra.mxu0 0.0
    %441 = vmatpush.msra.mxu0 %v421
    %442 = vmatmul.f32.gmra.mxu0 %v424
    %v443 = vpop.f32.mrf.mxu0
    %v444 = vadd.f32 0.0, %v443
    %445 = vdwg.mxu0
    %446 = vrot.lane.b32.xlu0 %v99, 64
    %v447 = vpop.permute.xlu0 %446
    %v450 = vsel %vm117, %v413, 0
    %452 = vmatpush.msra.mxu0 0.0
    %453 = vmatpush.msra.mxu0 0.0
    %454 = vmatpush.msra.mxu0 0.0
    %455 = vmatpush.msra.mxu0 0.0
    %456 = vmatpush.msra.mxu0 0.0
    %457 = vmatpush.msra.mxu0 0.0
    %458 = vmatpush.msra.mxu0 0.0
    %459 = vmatpush.msra.mxu0 0.0
    %460 = vmatpush.msra.mxu0 0.0
    %461 = vmatpush.msra.mxu0 0.0
    %462 = vmatpush.msra.mxu0 0.0
    %463 = vmatpush.msra.mxu0 0.0
    %464 = vmatpush.msra.mxu0 0.0
    %465 = vmatpush.msra.mxu0 0.0
    %466 = vmatpush.msra.mxu0 0.0
    %467 = vmatpush.msra.mxu0 %v447
    %468 = vmatmul.f32.gmra.mxu0 %v450
    %v469 = vpop.f32.mrf.mxu0
    %v470 = vadd.f32 0.0, %v469
    %471 = vdwg.mxu0
    %472 = vrot.lane.b32.xlu0 %v104, 64
    %v473 = vpop.permute.xlu0 %472
    %v476 = vsel %vm117, %v414, 0
    %478 = vmatpush.msra.mxu0 0.0
    %479 = vmatpush.msra.mxu0 0.0
    %480 = vmatpush.msra.mxu0 0.0
    %481 = vmatpush.msra.mxu0 0.0
    %482 = vmatpush.msra.mxu0 0.0
    %483 = vmatpush.msra.mxu0 0.0
    %484 = vmatpush.msra.mxu0 0.0
    %485 = vmatpush.msra.mxu0 0.0
    %486 = vmatpush.msra.mxu0 0.0
    %487 = vmatpush.msra.mxu0 0.0
    %488 = vmatpush.msra.mxu0 0.0
    %489 = vmatpush.msra.mxu0 0.0
    %490 = vmatpush.msra.mxu0 0.0
    %491 = vmatpush.msra.mxu0 0.0
    %492 = vmatpush.msra.mxu0 0.0
    %493 = vmatpush.msra.mxu0 %v473
    %494 = vmatmul.f32.gmra.mxu0 %v476
    %v495 = vpop.f32.mrf.mxu0
    %v496 = vadd.f32 0.0, %v495
    %497 = vdwg.mxu0
    %498 = vrot.lane.b32.xlu0 %v106, 64
    %v499 = vpop.permute.xlu0 %498
    %v502 = vsel %vm117, %v415, 0
    %504 = vmatpush.msra.mxu0 0.0
    %505 = vmatpush.msra.mxu0 0.0
    %506 = vmatpush.msra.mxu0 0.0
    %507 = vmatpush.msra.mxu0 0.0
    %508 = vmatpush.msra.mxu0 0.0
    %509 = vmatpush.msra.mxu0 0.0
    %510 = vmatpush.msra.mxu0 0.0
    %511 = vmatpush.msra.mxu0 0.0
    %512 = vmatpush.msra.mxu0 0.0
    %513 = vmatpush.msra.mxu0 0.0
    %514 = vmatpush.msra.mxu0 0.0
    %515 = vmatpush.msra.mxu0 0.0
    %516 = vmatpush.msra.mxu0 0.0
    %517 = vmatpush.msra.mxu0 0.0
    %518 = vmatpush.msra.mxu0 0.0
    %519 = vmatpush.msra.mxu0 %v499
    %520 = vmatmul.f32.gmra.mxu0 %v502
    %v521 = vpop.f32.mrf.mxu0
    %v522 = vadd.f32 0.0, %v521
    %523 = vdwg.mxu0
    %524 = vrot.lane.b32.xlu0 %v108, 64
    %v525 = vpop.permute.xlu0 %524
    %v528 = vsel %vm117, %v416, 0
    %530 = vmatpush.msra.mxu0 0.0
    %531 = vmatpush.msra.mxu0 0.0
    %532 = vmatpush.msra.mxu0 0.0
    %533 = vmatpush.msra.mxu0 0.0
    %534 = vmatpush.msra.mxu0 0.0
    %535 = vmatpush.msra.mxu0 0.0
    %536 = vmatpush.msra.mxu0 0.0
    %537 = vmatpush.msra.mxu0 0.0
    %538 = vmatpush.msra.mxu0 0.0
    %539 = vmatpush.msra.mxu0 0.0
    %540 = vmatpush.msra.mxu0 0.0
    %541 = vmatpush.msra.mxu0 0.0
    %542 = vmatpush.msra.mxu0 0.0
    %543 = vmatpush.msra.mxu0 0.0
    %544 = vmatpush.msra.mxu0 0.0
    %545 = vmatpush.msra.mxu0 %v525
    %546 = vmatmul.f32.gmra.mxu0 %v528
    %v547 = vpop.f32.mrf.mxu0
    %v548 = vadd.f32 0.0, %v547
    %549 = vdwg.mxu0
    %550 = vrot.lane.b32.xlu0 %v110, 64
    %v551 = vpop.permute.xlu0 %550
    %v554 = vsel %vm117, %v417, 0
    %556 = vmatpush.msra.mxu0 0.0
    %557 = vmatpush.msra.mxu0 0.0
    %558 = vmatpush.msra.mxu0 0.0
    %559 = vmatpush.msra.mxu0 0.0
    %560 = vmatpush.msra.mxu0 0.0
    %561 = vmatpush.msra.mxu0 0.0
    %562 = vmatpush.msra.mxu0 0.0
    %563 = vmatpush.msra.mxu0 0.0
    %564 = vmatpush.msra.mxu0 0.0
    %565 = vmatpush.msra.mxu0 0.0
    %566 = vmatpush.msra.mxu0 0.0
    %567 = vmatpush.msra.mxu0 0.0
    %568 = vmatpush.msra.mxu0 0.0
    %569 = vmatpush.msra.mxu0 0.0
    %570 = vmatpush.msra.mxu0 0.0
    %571 = vmatpush.msra.mxu0 %v551
    %572 = vmatmul.f32.gmra.mxu0 %v554
    %v573 = vpop.f32.mrf.mxu0
    %v574 = vadd.f32 0.0, %v573
    %575 = vdwg.mxu0
    %576 = vrot.lane.b32.xlu0 %v112, 64
    %v577 = vpop.permute.xlu0 %576
    %v580 = vsel %vm117, %v418, 0
    %582 = vmatpush.msra.mxu0 0.0
    %583 = vmatpush.msra.mxu0 0.0
    %584 = vmatpush.msra.mxu0 0.0
    %585 = vmatpush.msra.mxu0 0.0
    %586 = vmatpush.msra.mxu0 0.0
    %587 = vmatpush.msra.mxu0 0.0
    %588 = vmatpush.msra.mxu0 0.0
    %589 = vmatpush.msra.mxu0 0.0
    %590 = vmatpush.msra.mxu0 0.0
    %591 = vmatpush.msra.mxu0 0.0
    %592 = vmatpush.msra.mxu0 0.0
    %593 = vmatpush.msra.mxu0 0.0
    %594 = vmatpush.msra.mxu0 0.0
    %595 = vmatpush.msra.mxu0 0.0
    %596 = vmatpush.msra.mxu0 0.0
    %597 = vmatpush.msra.mxu0 %v577
    %598 = vmatmul.f32.gmra.mxu0 %v580
    %v599 = vpop.f32.mrf.mxu0
    %v600 = vadd.f32 0.0, %v599
    %601 = vdwg.mxu0
    %602 = vrot.lane.b32.xlu0 %v114, 64
    %v603 = vpop.permute.xlu0 %602
    %v606 = vsel %vm117, %v419, 0
    %608 = vmatpush.msra.mxu0 0.0
    %609 = vmatpush.msra.mxu0 0.0
    %610 = vmatpush.msra.mxu0 0.0
    %611 = vmatpush.msra.mxu0 0.0
    %612 = vmatpush.msra.mxu0 0.0
    %613 = vmatpush.msra.mxu0 0.0
    %614 = vmatpush.msra.mxu0 0.0
    %615 = vmatpush.msra.mxu0 0.0
    %616 = vmatpush.msra.mxu0 0.0
    %617 = vmatpush.msra.mxu0 0.0
    %618 = vmatpush.msra.mxu0 0.0
    %619 = vmatpush.msra.mxu0 0.0
    %620 = vmatpush.msra.mxu0 0.0
    %621 = vmatpush.msra.mxu0 0.0
    %622 = vmatpush.msra.mxu0 0.0
    %623 = vmatpush.msra.mxu0 %v603
    %624 = vmatmul.f32.gmra.mxu0 %v606
    %v625 = vpop.f32.mrf.mxu0
    %v626 = vadd.f32 0.0, %v625
    %627 = vdwg.mxu0
    %630 = vrot.lane.b32.xlu0 %v496, 8
    %v631 = vpop.permute.xlu0 %630
    %632 = vrot.lane.b32.xlu0 %v522, 8
    %v633 = vpop.permute.xlu0 %632
    %638 = vrot.lane.b32.xlu0 %v548, 16
    %v639 = vpop.permute.xlu0 %638
    %640 = vrot.lane.b32.xlu0 %v574, 16
    %v641 = vpop.permute.xlu0 %640
    %646 = vrot.lane.b32.xlu0 %v600, 24
    %v647 = vpop.permute.xlu0 %646
    %648 = vrot.lane.b32.xlu0 %v626, 24
    %v649 = vpop.permute.xlu0 %648
    %v652 = vsel %vm117, %v444, %v631
    %v653 = vsel %vm117, %v470, %v633
    %vm654 = vcmask 130048
    %v655 = vsel %vm654, %v652, %v639
    %v656 = vsel %vm654, %v653, %v641
    %vm657 = vcmask 195584
    %v658 = vsel %vm657, %v655, %v647
    %v659 = vsel %vm657, %v656, %v649
    %v660 = vld [vmem:[#allocation7] sm:$0xff]
    %v661 = vld [vmem:[#allocation7 + $0x8] sm:$0xff]
    %v662 = vld [vmem:[#allocation7 + $0x10] sm:$0xff]
    %v663 = vld [vmem:[#allocation7 + $0x18] sm:$0xff]
    %v664 = vld [vmem:[%s3] sm:$0x1]
    %v666 = vperm.slane %v664, 0
    %v669 = vsel %vm71, %v658, 0
    %v672 = vsel %vm71, %v659, 0
    %674 = vmatpush.msra.mxu0 0.0
    %675 = vmatpush.msra.mxu0 0.0
    %676 = vmatpush.msra.mxu0 0.0
    %677 = vmatpush.msra.mxu0 0.0
    %678 = vmatpush.msra.mxu0 0.0
    %679 = vmatpush.msra.mxu0 0.0
    %680 = vmatpush.msra.mxu0 0.0
    %681 = vmatpush.msra.mxu0 0.0
    %682 = vmatpush.msra.mxu0 0.0
    %683 = vmatpush.msra.mxu0 0.0
    %684 = vmatpush.msra.mxu0 0.0
    %685 = vmatpush.msra.mxu0 0.0
    %686 = vmatpush.msra.mxu0 %v663
    %687 = vmatpush.msra.mxu0 %v662
    %688 = vmatpush.msra.mxu0 %v661
    %689 = vmatpush.msra.mxu0 %v660
    %690 = vmatmul.f32.gmra.mxu0 %v669
    %v691 = vpop.f32.mrf.mxu0
    %v692 = vadd.f32 %v666, %v691
    %693 = vmatmul.f32.gmra.mxu0 %v672
    %v694 = vpop.f32.mrf.mxu0
    %v695 = vadd.f32 %v666, %v694
    %696 = vdwg.mxu0
    %697 = vst.msk [vmem:[#allocation8] sm:$0xff] %vm71, %v692
    %698 = vst.msk [vmem:[#allocation8 + $0x8] sm:$0xff] %vm71, %v695
    // Predicated region
    $region30: #{tpu_custom_call.1} parent=1 // pred_check
      _
    $region31: #{tpu_custom_call.1} parent=1 // pred_check_branch
      %700 = sbr.rel (0) target = $region33
    $region32: #{tpu_custom_call.1} parent=1 // pred_region
      %702 = vsyncadd [#allocation4], 0
      %s703 = sshll.u32 [#allocation8], 4
      %s704 = int_to_ptr.vmem [resolvable:$true] %s703
      %s705 = sshll.u32 %s4, 4
      %s706 = int_to_ptr.hbm [resolvable:$true] %s705
      %711 = dma.vmem_to_hbm [thread:$0]  %s704, 256, %s706, [#allocation4], 128, 128, 8
    $region33: #{tpu_custom_call.1} parent=1 // pred_fallthru
      _
    // Predicated region
    $region34: #{tpu_custom_call.1} parent=1 // pred_check
      _
    $region35: #{tpu_custom_call.1} parent=1 // pred_check_branch
      %713 = sbr.rel (0) target = $region37
    $region36: #{tpu_custom_call.1} parent=1 // pred_region
      %715 = dma.done [#allocation4], 256
    $region37: #{tpu_custom_call.1} parent=1 // pred_fallthru
      _
    %716 = vsyncpa [#allocation3], 1
    %717 = vsyncpa [#allocation6], 1
    %718 = vsyncpa [#allocation4], 1

</llo_original>
